<compile_context>
chip_gen: v5e
topology: v5e:2x2
jax: 0.10.0
libtpu: 0.0.40
codegen_flags: <defaults>
</compile_context>

<pallas_src>
import functools

import numpy as np
import jax
import jax.numpy as jnp
from jax import lax
from jax.experimental import pallas as pl
from jax.experimental.pallas import tpu as pltpu


def _round_up(a: int, b: int) -> int:
    return ((a + b - 1) // b) * b


def _hi_lo(a):
    """Split f32 -> (hi, lo) with hi = bf16-rounded(a); hi + lo == a exactly in f32."""
    hi = a.astype(jnp.bfloat16).astype(jnp.float32)
    return hi, a - hi


def _pack_slab(pred, target, x, batch=None):
    """Node-minor f32 slab (r, N): rows = [pred_d | target_d | fx | fy | (batch)]."""
    n = pred.shape[0]
    p = pred.reshape(n, -1).astype(jnp.float32)
    t = target.reshape(n, -1).astype(jnp.float32)
    f = x[:, 3:5].astype(jnp.float32)                        # only the force columns
    cols = [p, t, f]
    if batch is not None:
        cols.append(batch.reshape(n, 1).astype(jnp.float32))  # ids < 2^24 -> exact in f32
    slab = jnp.concatenate(cols, axis=1).T                   # (r, N): node axis on lanes
    return slab, p.shape[1]


def _pad_lanes(slab, tn):
    """Pad the node (lane) axis up to a multiple of tn so every block is in-bounds and the
    MXU contraction dim is 128-aligned.  Padded columns are zero and masked in-kernel."""
    n = slab.shape[1]
    n_pad = _round_up(n, tn)
    if n_pad != n:
        slab = jnp.pad(slab, ((0, 0), (0, n_pad - n)))
    return slab, n_pad


# --------------------------------------------------------------------------------------
# Kernel 1: batched path.  One streaming pass over node tiles; per tile a single MXU
# matmul produces per-graph [sum_hi, sum_lo, count, force_hi, force_lo] contributions.
# --------------------------------------------------------------------------------------
def _graph_loss_kernel(slab_ref, out_ref, *, d: int, n: int):
    i = pl.program_id(0)
    tn = slab_ref.shape[1]
    gp = out_ref.shape[1]

    @pl.when(i == 0)
    def _init():
        out_ref[...] = jnp.zeros_like(out_ref)

    # Tail mask along the lane axis (true node count n is static).
    col = lax.broadcasted_iota(jnp.int32, (1, tn), 1)
    valid = (i * tn + col) < n                               # (1, tn) bool

    slab = slab_ref[...]                                     # (2d+3, tn) f32
    p = slab[0:d, :]
    t = slab[d:2 * d, :]
    diff = jnp.abs(p * p - t * t)                            # (d, tn)
    v = jnp.sum(diff, axis=0, keepdims=True)                 # (1, tn) per-node value
    v = jnp.where(valid, v, 0.0)

    fx = slab[2 * d:2 * d + 1, :]
    fy = slab[2 * d + 1:2 * d + 2, :]
    fmag = jnp.where(valid, jnp.sqrt(fx * fx + fy * fy), 0.0)  # (1, tn)

    # One-hot graph membership, graphs on sublanes, nodes on lanes.
    bid = slab[2 * d + 2:2 * d + 3, :].astype(jnp.int32)     # (1, tn)
    gids = lax.broadcasted_iota(jnp.int32, (gp, tn), 0)
    member = (bid == gids) & valid
    onehot = jnp.where(member, 1.0, 0.0).astype(jnp.bfloat16)  # (gp, tn), exact in bf16

    ones = jnp.where(valid, 1.0, 0.0)                        # (1, tn)
    v_hi, v_lo = _hi_lo(v)
    f_hi, f_lo = _hi_lo(fmag)
    stacked = jnp.concatenate([v_hi, v_lo, ones, f_hi, f_lo],
                              axis=0).astype(jnp.bfloat16)    # (5, tn)

    # MXU NT contraction over the node (lane) axis -> (5, gp), f32 accumulation.
    res = lax.dot_general(stacked, onehot, (((1,), (1,)), ((), ())),
                          preferred_element_type=jnp.float32)
    out_ref[...] += res


def _graph_loss_sums(pred, target, batch, x, num_graphs: int, *,
                     max_node_tile: int = 8192, onehot_budget_bytes: int = 4 << 20):
    slab, d = _pack_slab(pred, target, x, batch)
    r, n = slab.shape
    gp = _round_up(max(int(num_graphs), 1), 128)             # lane-dense graph axis

    # Tile: largest multiple of 128 within both the user cap and the one-hot VMEM budget.
    cap = max(128, (min(max_node_tile, onehot_budget_bytes // (4 * gp)) // 128) * 128)
    tn = min(_round_up(n, 128), cap)
    slab, n_pad = _pad_lanes(slab, tn)
    num_tiles = n_pad // tn

    kernel = functools.partial(_graph_loss_kernel, d=d, n=n)
    out = pl.pallas_call(
        kernel,
        out_shape=jax.ShapeDtypeStruct((5, gp), jnp.float32),
        grid=(num_tiles,),
        in_specs=[pl.BlockSpec((r, tn), lambda i: (0, i))],
        out_specs=pl.BlockSpec((5, gp), lambda i: (0, 0)),    # resident accumulator
        compiler_params=pltpu.CompilerParams(
            dimension_semantics=("arbitrary",),               # sequential reduction axis
        ),
    )(slab)

    graph_sums = out[0, :num_graphs] + out[1, :num_graphs]
    elem_counts = out[2, :num_graphs] * jnp.float32(d)        # nodes-per-graph * dims
    force_sum = jnp.sum(out[3, :] + out[4, :])                # total force over all nodes
    return graph_sums, elem_counts, force_sum


# --------------------------------------------------------------------------------------
# Kernel 2: batch=None path.  Sum of |pred - target| and total force in one pass over the
# same lane-dense slab (minus the batch row); lane-wide deferred accumulators.
# --------------------------------------------------------------------------------------
def _mae_force_kernel(slab_ref, out_ref, acc_ref, *, d: int, n: int):
    i = pl.program_id(0)
    tn = slab_ref.shape[1]

    @pl.when(i == 0)
    def _init():
        acc_ref[...] = jnp.zeros_like(acc_ref)

    col = lax.broadcasted_iota(jnp.int32, (1, tn), 1)
    valid = (i * tn + col) < n

    slab = slab_ref[...]                                      # (2d+2, tn) f32
    p = slab[0:d, :]
    t = slab[d:2 * d, :]
    ad = jnp.sum(jnp.abs(p - t), axis=0, keepdims=True)       # (1, tn)
    ad = jnp.where(valid, ad, 0.0)

    fx = slab[2 * d:2 * d + 1, :]
    fy = slab[2 * d + 1:2 * d + 2, :]
    fmag = jnp.where(valid, jnp.sqrt(fx * fx + fy * fy), 0.0)

    acc_ref[...] += jnp.concatenate([ad, fmag], axis=0)       # (2, tn) pure-VPU adds

    @pl.when(i == pl.num_programs(0) - 1)
    def _finish():
        out_ref[0, 0] = jnp.sum(acc_ref[0:1, :])              # single deferred reduce
        out_ref[0, 1] = jnp.sum(acc_ref[1:2, :])


def _mae_force_sums(pred, target, x, *, max_node_tile: int = 8192):
    slab, d = _pack_slab(pred, target, x, batch=None)
    r, n = slab.shape
    cap = max(128, (max_node_tile // 128) * 128)
    tn = min(_round_up(n, 128), cap)
    slab, n_pad = _pad_lanes(slab, tn)
    num_tiles = n_pad // tn

    kernel = functools.partial(_mae_force_kernel, d=d, n=n)
    out = pl.pallas_call(
        kernel,
        out_shape=jax.ShapeDtypeStruct((1, 2), jnp.float32),
        grid=(num_tiles,),
        in_specs=[pl.BlockSpec((r, tn), lambda i: (0, i))],
        out_specs=pl.BlockSpec((1, 2), lambda i: (0, 0)),
        scratch_shapes=[pltpu.VMEM((2, tn), jnp.float32)],
        compiler_params=pltpu.CompilerParams(
            dimension_semantics=("arbitrary",),
        ),
    )(slab)
    return out[0, 0], out[0, 1]


# --------------------------------------------------------------------------------------
# Module wrapper (JAX/Pallas port of the PyTorch ScaledGraphMSELoss)
# --------------------------------------------------------------------------------------
class ScaledGraphMSELoss:
    def __init__(self, force_scaling=True, min_scale=0.1, max_node_tile=8192):
        self.force_scaling = bool(force_scaling)
        self.min_scale = float(min_scale)
        self.max_node_tile = int(max_node_tile)

    def __call__(self, pred, target, batch=None, x=None, num_graphs=None):
        pred = jnp.asarray(pred)
        target = jnp.asarray(target)
        n = pred.shape[0]
        if x is None:                                         # only legal if force_scaling=False
            x = jnp.zeros((n, 5), dtype=jnp.float32)
        x = jnp.asarray(x)
        assert x.shape[1] >= 5, "x must have >= 5 feature columns (force is x[:, 3:5])"

        if batch is None:
            ad_sum, force_sum = _mae_force_sums(
                pred, target, x, max_node_tile=self.max_node_tile)
            mae = ad_sum / jnp.float32(pred.size)
            if self.force_scaling:
                return mae * jnp.maximum(force_sum, self.min_scale)
            return mae

        batch = jnp.asarray(batch)
        if num_graphs is None:
            # Fallback mirrors PyTorch's `batch.max().item() + 1` (device->host sync).
            # Pass num_graphs explicitly to keep the whole loss inside a jitted step.
            num_graphs = int(jax.device_get(jnp.max(batch))) + 1
        graph_sums, elem_counts, force_sum = _graph_loss_sums(
            pred, target, batch, x, int(num_graphs), max_node_tile=self.max_node_tile)
        graph_means = graph_sums / elem_counts               # empty graph -> 0/0 (== PyTorch NaN)
        if self.force_scaling:
            graph_means = graph_means * jnp.maximum(force_sum, self.min_scale)
        return jnp.mean(graph_means) * 100.0


if __name__ == "__main__":
    key = jax.random.PRNGKey(0)
    k_x, k_p, k_t = jax.random.split(key, 3)

    num_nodes, num_feats, out_dim = 200, 6, 3
    graph_sizes = [40, 60, 70, 30]                            # 4 graphs, 200 nodes total
    num_graphs = len(graph_sizes)

    x = jax.random.normal(k_x, (num_nodes, num_feats), dtype=jnp.float32)
    pred = jax.random.normal(k_p, (num_nodes, out_dim), dtype=jnp.float32)
    target = jax.random.normal(k_t, (num_nodes, out_dim), dtype=jnp.float32) + 0.1
    batch = jnp.concatenate(
        [jnp.full((s,), i, dtype=jnp.int32) for i, s in enumerate(graph_sizes)])

    loss_fn = ScaledGraphMSELoss(force_scaling=True, min_scale=0.1)
    out_batched = jax.block_until_ready(loss_fn(pred, target, batch, x, num_graphs=num_graphs))
    out_nobatch = jax.block_until_ready(loss_fn(pred, target, None, x))
    # Fallback path without explicit num_graphs (host-sync, mirrors PyTorch exactly).
    out_batched_fb = jax.block_until_ready(loss_fn(pred, target, batch, x))

    # Also exercise the multi-tile / masked-partial-tile path with a small lane tile.
    loss_fn_tiled = ScaledGraphMSELoss(force_scaling=True, min_scale=0.1, max_node_tile=128)
    out_batched_tiled = jax.block_until_ready(
        loss_fn_tiled(pred, target, batch, x, num_graphs=num_graphs))
    out_nobatch_tiled = jax.block_until_ready(loss_fn_tiled(pred, target, None, x))

    # Pure-numpy reference (follows the PyTorch module exactly).
    p_np, t_np = np.asarray(pred), np.asarray(target)
    b_np, x_np = np.asarray(batch), np.asarray(x)
    total_force = float(np.sum(np.sqrt(x_np[:, 3] ** 2 + x_np[:, 4] ** 2)))
    scale = max(total_force, 0.1)

    g_losses = []
    for g in range(int(b_np.max()) + 1):
        m = b_np == g
        g_losses.append(float(np.mean(np.abs(p_np[m] ** 2 - t_np[m] ** 2))) * scale)
    ref_batched = float(np.mean(np.asarray(g_losses)) * 100.0)
    ref_nobatch = float(np.mean(np.abs(p_np - t_np))) * scale

    tol = dict(rtol=2e-4, atol=1e-4)
    assert out_batched.shape == (), f"expected scalar, got {out_batched.shape}"
    assert np.allclose(float(out_batched), ref_batched, **tol), (float(out_batched), ref_batched)
    assert np.allclose(float(out_batched_fb), ref_batched, **tol), (float(out_batched_fb), ref_batched)
    assert np.allclose(float(out_batched_tiled), ref_batched, **tol), (float(out_batched_tiled), ref_batched)
    assert np.allclose(float(out_nobatch), ref_nobatch, **tol), (float(out_nobatch), ref_nobatch)
    assert np.allclose(float(out_nobatch_tiled), ref_nobatch, **tol), (float(out_nobatch_tiled), ref_nobatch)

    print("KERNEL_OK")
</pallas_src>

<mosaic_0001>
module attributes {stable_mosaic.version = 11 : i64} {
  func.func @_graph_loss_kernel(%arg0: i32, %arg1: memref<9x256xf32, #tpu.memory_space<vmem>>, %arg2: memref<5x128xf32, #tpu.memory_space<vmem>>) attributes {dimension_semantics = [#tpu.dimension_semantics<arbitrary>], iteration_bounds = array<i64: 1>, scalar_prefetch = 0 : i64, scratch_operands = 0 : i64, tpu.core_type = #tpu.core_type<tc>, window_params = [{transform_indices = @transform_0, window_bounds = array<i64: 9, 256>}, {pipeline_mode = #tpu.pipeline_mode<synchronous>, transform_indices = @transform_1, window_bounds = array<i64: 5, 128>}]} {
    %c0_i32 = arith.constant 0 : i32
    %0 = arith.cmpi eq, %arg0, %c0_i32 : i32
    %1 = arith.extui %0 : i1 to i32
    %c0_i32_0 = arith.constant 0 : i32
    %2 = arith.cmpi ne, %1, %c0_i32_0 : i32
    scf.if %2 {
      %cst_13 = arith.constant 0.000000e+00 : f32
      %54 = vector.broadcast %cst_13 : f32 to vector<5x128xf32>
      %c0_14 = arith.constant 0 : index
      %c0_15 = arith.constant 0 : index
      %55 = vector.load %arg2[%c0_14, %c0_15] : memref<5x128xf32, #tpu.memory_space<vmem>>, vector<5x128xf32>
      tpu.vector_store %arg2[%c0_14, %c0_15], %54 {strides = array<i32>} : memref<5x128xf32, #tpu.memory_space<vmem>>, vector<5x128xf32>,
    } else {
    }
    %3 = tpu.iota {dimensions = array<i32: 1>} : vector<1x256xi32>
    %c256_i32 = arith.constant 256 : i32
    %4 = arith.muli %arg0, %c256_i32 : i32
    %5 = vector.broadcast %4 : i32 to vector<1x256xi32>
    %6 = arith.addi %5, %3 : vector<1x256xi32>
    %c200_i32 = arith.constant 200 : i32
    %7 = vector.broadcast %c200_i32 : i32 to vector<1x256xi32>
    %8 = arith.cmpi slt, %6, %7 : vector<1x256xi32>
    %c0 = arith.constant 0 : index
    %c0_1 = arith.constant 0 : index
    %9 = vector.load %arg1[%c0, %c0_1] : memref<9x256xf32, #tpu.memory_space<vmem>>, vector<9x256xf32>
    %10 = vector.extract_strided_slice %9 {offsets = [0, 0], sizes = [3, 256], strides = [1, 1]} : vector<9x256xf32> to vector<3x256xf32>
    %11 = vector.extract_strided_slice %9 {offsets = [3, 0], sizes = [3, 256], strides = [1, 1]} : vector<9x256xf32> to vector<3x256xf32>
    %12 = arith.mulf %10, %10 : vector<3x256xf32>
    %13 = arith.mulf %11, %11 : vector<3x256xf32>
    %14 = arith.subf %12, %13 : vector<3x256xf32>
    %15 = math.absf %14 : vector<3x256xf32>
    %cst = arith.constant dense<0.000000e+00> : vector<256xf32>
    %16 = vector.multi_reduction <add>, %15, %cst [0] : vector<3x256xf32> to vector<256xf32>
    %17 = vector.shape_cast %16 : vector<256xf32> to vector<1x256xf32>
    %cst_2 = arith.constant 0.000000e+00 : f32
    %18 = vector.broadcast %cst_2 : f32 to vector<1x256xf32>
    %19 = arith.select %8, %17, %18 : vector<1x256xi1>, vector<1x256xf32>
    %20 = vector.extract_strided_slice %9 {offsets = [6, 0], sizes = [1, 256], strides = [1, 1]} : vector<9x256xf32> to vector<1x256xf32>
    %21 = vector.extract_strided_slice %9 {offsets = [7, 0], sizes = [1, 256], strides = [1, 1]} : vector<9x256xf32> to vector<1x256xf32>
    %22 = arith.mulf %20, %20 : vector<1x256xf32>
    %23 = arith.mulf %21, %21 : vector<1x256xf32>
    %24 = arith.addf %22, %23 : vector<1x256xf32>
    %25 = math.sqrt %24 : vector<1x256xf32>
    %cst_3 = arith.constant 0.000000e+00 : f32
    %26 = vector.broadcast %cst_3 : f32 to vector<1x256xf32>
    %27 = arith.select %8, %25, %26 : vector<1x256xi1>, vector<1x256xf32>
    %28 = vector.extract_strided_slice %9 {offsets = [8, 0], sizes = [1, 256], strides = [1, 1]} : vector<9x256xf32> to vector<1x256xf32>
    %29 = arith.fptosi %28 : vector<1x256xf32> to vector<1x256xi32>
    %30 = tpu.iota {dimensions = array<i32: 0>} : vector<128x256xi32>
    %31 = vector.broadcast %29 : vector<1x256xi32> to vector<128x256xi32>
    %32 = arith.cmpi eq, %31, %30 : vector<128x256xi32>
    %33 = vector.broadcast %8 : vector<1x256xi1> to vector<128x256xi1>
    %34 = arith.andi %32, %33 : vector<128x256xi1>
    %cst_4 = arith.constant 1.000000e+00 : f32
    %cst_5 = arith.constant 0.000000e+00 : f32
    %35 = vector.broadcast %cst_4 : f32 to vector<128x256xf32>
    %36 = vector.broadcast %cst_5 : f32 to vector<128x256xf32>
    %37 = arith.select %34, %35, %36 : vector<128x256xi1>, vector<128x256xf32>
    %38 = arith.truncf %37 : vector<128x256xf32> to vector<128x256xbf16>
    %cst_6 = arith.constant 1.000000e+00 : f32
    %cst_7 = arith.constant 0.000000e+00 : f32
    %39 = vector.broadcast %cst_6 : f32 to vector<1x256xf32>
    %40 = vector.broadcast %cst_7 : f32 to vector<1x256xf32>
    %41 = arith.select %8, %39, %40 : vector<1x256xi1>, vector<1x256xf32>
    %42 = arith.truncf %19 : vector<1x256xf32> to vector<1x256xbf16>
    %43 = arith.extf %42 : vector<1x256xbf16> to vector<1x256xf32>
    %44 = arith.subf %19, %43 : vector<1x256xf32>
    %45 = arith.truncf %27 : vector<1x256xf32> to vector<1x256xbf16>
    %46 = arith.extf %45 : vector<1x256xbf16> to vector<1x256xf32>
    %47 = arith.subf %27, %46 : vector<1x256xf32>
    %48 = tpu.concatenate %43, %44, %41, %46, %47 in 0 : vector<1x256xf32>, vector<1x256xf32>, vector<1x256xf32>, vector<1x256xf32>, vector<1x256xf32> -> vector<5x256xf32>
    %49 = arith.truncf %48 : vector<5x256xf32> to vector<5x256xbf16>
    %cst_8 = arith.constant dense<0.000000e+00> : vector<5x128xf32>
    %50 = tpu.matmul %49, %38, %cst_8 {dimension_numbers = #tpu.dot_dimension_numbers<[1], [1], [0], [0], [0, 0, 1, 0], [], []>} : vector<5x256xbf16>, vector<128x256xbf16>, vector<5x128xf32> -> vector<5x128xf32>
    %c0_9 = arith.constant 0 : index
    %c0_10 = arith.constant 0 : index
    %51 = vector.load %arg2[%c0_9, %c0_10] : memref<5x128xf32, #tpu.memory_space<vmem>>, vector<5x128xf32>
    %52 = arith.addf %51, %50 : vector<5x128xf32>
    %c0_11 = arith.constant 0 : index
    %c0_12 = arith.constant 0 : index
    %53 = vector.load %arg2[%c0_11, %c0_12] : memref<5x128xf32, #tpu.memory_space<vmem>>, vector<5x128xf32>
    tpu.vector_store %arg2[%c0_11, %c0_12], %52 {strides = array<i32>} : memref<5x128xf32, #tpu.memory_space<vmem>>, vector<5x128xf32>,
    return
  }
  func.func @transform_0(%arg0: i32) -> (i32, i32) {
    %c0_i32 = arith.constant 0 : i32
    %c0_i32_0 = arith.constant 0 : i32
    return %c0_i32, %arg0 : i32, i32
  }
  func.func @transform_1(%arg0: i32) -> (i32, i32) {
    %c0_i32 = arith.constant 0 : i32
    %c0_i32_0 = arith.constant 0 : i32
    %c0_i32_1 = arith.constant 0 : i32
    return %c0_i32, %c0_i32_0 : i32, i32
  }
}

</mosaic_0001>

<llo_original>
// kernel: tpu_custom_call.1
$region0: #{tpu_custom_call.1}
  #allocation0 [shape = 'u32[]', space=smem, size = 0x4, offset = 0x4, fixed_abs, tag = 'smem constant byte address 0x4 - core index']
  #allocation1 [shape = 'u32[72,128]{1,0:T(1,128)}', space=vmem, size = 0x9000, scoped, tag = 'internal scratch']
  %s0 = inlined_call_operand.hbm [shape: f32[9,256], index: 0, kind: input, shape index: {}]
  %s1 = inlined_call_operand.hbm [shape: f32[5,128], index: 1, kind: output, shape index: {}]
  %s2 = sld [smem:[#allocation0]]
  $region22: #{tpu_custom_call.1} parent=0
    _
  %s4 = ssub.s32 1, %s2
  %s5 = scalar_select 0, %s4, %s2
  $region1: #{tpu_custom_call.1} parent=0
    #allocation2 [shape = 'u8[16384]{0}', space=vmem, size = 0x4000, scoped, tag = 'input window, operand 0, single buffered']
    #allocation3 [shape = 's32[1]{0}', space=sflag, size = 0x4, scoped, tag = 'scoped memory for tpu_custom_call.1']
    #allocation4 [shape = 's32[1]{0}', space=sflag, size = 0x4, scoped, tag = 'scoped memory for tpu_custom_call.1']
    #allocation5 [shape = 'u8[4096]{0}', space=vmem, size = 0x1000, scoped, tag = 'output window, operand 0, single buffered']
    %6 = vsyncpa [#allocation3], 0
    %7 = vsyncpa [#allocation4], 0
    // Predicated region
    $region2: #{tpu_custom_call.1} parent=1 // pred_check
      _
    $region3: #{tpu_custom_call.1} parent=1 // pred_check_branch
      %9 = sbr.rel (0) target = $region5
    $region4: #{tpu_custom_call.1} parent=1 // pred_region
      %11 = vsyncadd [#allocation3], 0
      %s12 = sshll.u32 %s0, 4
      %s13 = int_to_ptr.hbm [resolvable:$true] %s12
      %s14 = sshll.u32 [#allocation2], 4
      %s15 = int_to_ptr.vmem [resolvable:$true] %s14
      %20 = dma.hbm_to_vmem [thread:$0]  %s13, 512, %s15, [#allocation3], 256, 256, 16
    $region5: #{tpu_custom_call.1} parent=1 // pred_fallthru
      _
    // Predicated region
    $region6: #{tpu_custom_call.1} parent=1 // pred_check
      _
    $region7: #{tpu_custom_call.1} parent=1 // pred_check_branch
      %22 = sbr.rel (0) target = $region9
    $region8: #{tpu_custom_call.1} parent=1 // pred_region
      %24 = dma.done [#allocation3], 512
    $region9: #{tpu_custom_call.1} parent=1 // pred_fallthru
      _
    %p25 = scmp.eq.s32.totalorder 0, 0
    // Predicated region
    $region10: #{tpu_custom_call.1} parent=1 // pred_check
      %p26 = pneg %p25
    $region11: #{tpu_custom_call.1} parent=1 // pred_check_branch
      %28 = sbr.rel (%p26) target = $region13
    $region12: #{tpu_custom_call.1} parent=1 // pred_region
      %29 = vst [vmem:[#allocation5] sm:$0x1f] 0.0
    $region13: #{tpu_custom_call.1} parent=1 // pred_fallthru
      _
    %v30 = vlaneseq
    %v31 = vand.u32 %v30, 127
    %v32 = vadd.s32 %v31, 128
    %s33 = smul.u32 0, 256
    %v34 = vstv %s33
    %v35 = vadd.s32 %v34, %v31
    %v36 = vadd.s32 %v34, %v32
    %vm37 = vcmp.lt.s32.totalorder %v35, 200
    %vm38 = vcmp.lt.s32.totalorder %v36, 200
    %v39 = vld [vmem:[#allocation2] sm:$0xff]
    %v40 = vld [vmem:[#allocation2 + $0x8] sm:$0xff]
    %v41 = vld [vmem:[#allocation2 + $0x10] sm:$0x1]
    %v42 = vld [vmem:[#allocation2 + $0x18] sm:$0x1]
    %v43 = vmul.f32 %v39, %v39
    %v44 = vmul.f32 %v40, %v40
    %v47 = vrot.slane %v43, 3
    %v48 = vrot.slane %v44, 3
    %v51 = vsub.f32 %v43, %v47
    %v52 = vsub.f32 %v44, %v48
    %v53 = vand.u32 2147483647, %v51
    %v54 = vand.u32 2147483647, %v52
    %vm55 = vcmask 1042432
    %v56 = vsel %vm55, %v53, 0.0
    %v57 = vrot.slane %v56, 4
    %v58 = vadd.f32 %v56, %v57
    %v59 = vrot.slane %v58, 2
    %v60 = vadd.f32 %v58, %v59
    %v61 = vrot.slane %v60, 1
    %v62 = vadd.f32 %v60, %v61
    %v63 = vsel %vm55, %v54, 0.0
    %v64 = vrot.slane %v63, 4
    %v65 = vadd.f32 %v63, %v64
    %v66 = vrot.slane %v65, 2
    %v67 = vadd.f32 %v65, %v66
    %v68 = vrot.slane %v67, 1
    %v69 = vadd.f32 %v67, %v68
    %v70 = vsel %vm37, %v62, 0.0
    %v71 = vsel %vm38, %v69, 0.0
    %v72 = vrot.slane %v43, 1
    %v73 = vrot.slane %v44, 1
    %v76 = vadd.f32 %v43, %v72
    %v77 = vadd.f32 %v44, %v73
    %v78 = vrsqrt.pop %v76
    %v79 = vmul.f32 %v78, %v76
    %v80 = vmul.f32 %v79, %v78
    %v81 = vmul.f32 0.5, %v80
    %v82 = vsub.f32 1.5, %v81
    %v83 = vmul.f32 %v78, %v82
    %v84 = vmul.f32 %v76, %v83
    %vm85 = vcmp.eq.f32.partialorder %v76, inf
    %v86 = vsel %vm85, %v76, %v84
    %vm87 = vcmp.eq.f32.partialorder %v76, 0.0
    %v88 = vand.u32 %v76, 2147483648
    %v89 = vsel %vm87, %v88, %v86
    %v90 = vrsqrt.pop %v77
    %v91 = vmul.f32 %v90, %v77
    %v92 = vmul.f32 %v91, %v90
    %v93 = vmul.f32 0.5, %v92
    %v94 = vsub.f32 1.5, %v93
    %v95 = vmul.f32 %v90, %v94
    %v96 = vmul.f32 %v77, %v95
    %vm97 = vcmp.eq.f32.partialorder %v77, inf
    %v98 = vsel %vm97, %v77, %v96
    %vm99 = vcmp.eq.f32.partialorder %v77, 0.0
    %v100 = vand.u32 %v77, 2147483648
    %v101 = vsel %vm99, %v100, %v98
    %v102 = vsel %vm37, %v89, 0.0
    %v103 = vsel %vm38, %v101, 0.0
    %v104 = vcvt.f32.s32.to.zero.pseudo %v41
    %v105 = vcvt.f32.s32.to.zero.pseudo %v42
    %v106 = vlaneseq
    %v107 = vshrl.u32 %v106, 7
    %v108 = vadd.s32 %v107, 8
    %v109 = vadd.s32 %v107, 16
    %v110 = vadd.s32 %v107, 24
    %v111 = vadd.s32 %v107, 32
    %v112 = vadd.s32 %v107, 40
    %v113 = vadd.s32 %v107, 48
    %v114 = vadd.s32 %v107, 56
    %v115 = vadd.s32 %v107, 64
    %v116 = vadd.s32 %v107, 72
    %v117 = vadd.s32 %v107, 80
    %v118 = vadd.s32 %v107, 88
    %v119 = vadd.s32 %v107, 96
    %v120 = vadd.s32 %v107, 104
    %v121 = vadd.s32 %v107, 112
    %v122 = vadd.s32 %v107, 120
    %v123 = vperm.slane %v104, 0
    %v124 = vperm.slane %v105, 0
    %vm125 = vcmp.eq.s32.totalorder %v123, %v107
    %vm126 = vcmp.eq.s32.totalorder %v124, %v107
    %vm127 = vcmp.eq.s32.totalorder %v123, %v108
    %vm128 = vcmp.eq.s32.totalorder %v124, %v108
    %vm129 = vcmp.eq.s32.totalorder %v123, %v109
    %vm130 = vcmp.eq.s32.totalorder %v124, %v109
    %vm131 = vcmp.eq.s32.totalorder %v123, %v110
    %vm132 = vcmp.eq.s32.totalorder %v124, %v110
    %vm133 = vcmp.eq.s32.totalorder %v123, %v111
    %vm134 = vcmp.eq.s32.totalorder %v124, %v111
    %vm135 = vcmp.eq.s32.totalorder %v123, %v112
    %vm136 = vcmp.eq.s32.totalorder %v124, %v112
    %vm137 = vcmp.eq.s32.totalorder %v123, %v113
    %vm138 = vcmp.eq.s32.totalorder %v124, %v113
    %vm139 = vcmp.eq.s32.totalorder %v123, %v114
    %vm140 = vcmp.eq.s32.totalorder %v124, %v114
    %vm141 = vcmp.eq.s32.totalorder %v123, %v115
    %vm142 = vcmp.eq.s32.totalorder %v124, %v115
    %vm143 = vcmp.eq.s32.totalorder %v123, %v116
    %vm144 = vcmp.eq.s32.totalorder %v124, %v116
    %vm145 = vcmp.eq.s32.totalorder %v123, %v117
    %vm146 = vcmp.eq.s32.totalorder %v124, %v117
    %vm147 = vcmp.eq.s32.totalorder %v123, %v118
    %vm148 = vcmp.eq.s32.totalorder %v124, %v118
    %vm149 = vcmp.eq.s32.totalorder %v123, %v119
    %vm150 = vcmp.eq.s32.totalorder %v124, %v119
    %vm151 = vcmp.eq.s32.totalorder %v123, %v120
    %vm152 = vcmp.eq.s32.totalorder %v124, %v120
    %vm153 = vcmp.eq.s32.totalorder %v123, %v121
    %vm154 = vcmp.eq.s32.totalorder %v124, %v121
    %vm155 = vcmp.eq.s32.totalorder %v123, %v122
    %vm156 = vcmp.eq.s32.totalorder %v124, %v122
    %v157 = vsel %vm37, 1, 0
    %v158 = vsel %vm38, 1, 0
    %vm159 = vcmp.eq.s32.totalorder %v157, 1
    %vm160 = vcmp.eq.s32.totalorder %v158, 1
    %vm161 = vmand %vm125, %vm159
    %vm162 = vmand %vm126, %vm160
    %vm163 = vmand %vm127, %vm159
    %vm164 = vmand %vm128, %vm160
    %vm165 = vmand %vm129, %vm159
    %vm166 = vmand %vm130, %vm160
    %vm167 = vmand %vm131, %vm159
    %vm168 = vmand %vm132, %vm160
    %vm169 = vmand %vm133, %vm159
    %vm170 = vmand %vm134, %vm160
    %vm171 = vmand %vm135, %vm159
    %vm172 = vmand %vm136, %vm160
    %vm173 = vmand %vm137, %vm159
    %vm174 = vmand %vm138, %vm160
    %vm175 = vmand %vm139, %vm159
    %vm176 = vmand %vm140, %vm160
    %vm177 = vmand %vm141, %vm159
    %vm178 = vmand %vm142, %vm160
    %vm179 = vmand %vm143, %vm159
    %vm180 = vmand %vm144, %vm160
    %vm181 = vmand %vm145, %vm159
    %vm182 = vmand %vm146, %vm160
    %vm183 = vmand %vm147, %vm159
    %vm184 = vmand %vm148, %vm160
    %vm185 = vmand %vm149, %vm159
    %vm186 = vmand %vm150, %vm160
    %vm187 = vmand %vm151, %vm159
    %vm188 = vmand %vm152, %vm160
    %vm189 = vmand %vm153, %vm159
    %vm190 = vmand %vm154, %vm160
    %vm191 = vmand %vm155, %vm159
    %vm192 = vmand %vm156, %vm160
    %v193 = vsel %vm161, 1.0, 0.0
    %v194 = vsel %vm162, 1.0, 0.0
    %v195 = vsel %vm163, 1.0, 0.0
    %v196 = vsel %vm164, 1.0, 0.0
    %v197 = vsel %vm165, 1.0, 0.0
    %v198 = vsel %vm166, 1.0, 0.0
    %v199 = vsel %vm167, 1.0, 0.0
    %v200 = vsel %vm168, 1.0, 0.0
    %v201 = vsel %vm169, 1.0, 0.0
    %v202 = vsel %vm170, 1.0, 0.0
    %v203 = vsel %vm171, 1.0, 0.0
    %v204 = vsel %vm172, 1.0, 0.0
    %v205 = vsel %vm173, 1.0, 0.0
    %v206 = vsel %vm174, 1.0, 0.0
    %v207 = vsel %vm175, 1.0, 0.0
    %v208 = vsel %vm176, 1.0, 0.0
    %v209 = vsel %vm177, 1.0, 0.0
    %v210 = vsel %vm178, 1.0, 0.0
    %v211 = vsel %vm179, 1.0, 0.0
    %v212 = vsel %vm180, 1.0, 0.0
    %v213 = vsel %vm181, 1.0, 0.0
    %v214 = vsel %vm182, 1.0, 0.0
    %v215 = vsel %vm183, 1.0, 0.0
    %v216 = vsel %vm184, 1.0, 0.0
    %v217 = vsel %vm185, 1.0, 0.0
    %v218 = vsel %vm186, 1.0, 0.0
    %v219 = vsel %vm187, 1.0, 0.0
    %v220 = vsel %vm188, 1.0, 0.0
    %v221 = vsel %vm189, 1.0, 0.0
    %v222 = vsel %vm190, 1.0, 0.0
    %v223 = vsel %vm191, 1.0, 0.0
    %v224 = vsel %vm192, 1.0, 0.0
    %v225 = vpack.c.bf16 %v195, %v193
    %v226 = vpack.c.bf16 %v196, %v194
    %v227 = vpack.c.bf16 %v199, %v197
    %v228 = vpack.c.bf16 %v200, %v198
    %v229 = vpack.c.bf16 %v203, %v201
    %v230 = vpack.c.bf16 %v204, %v202
    %v231 = vpack.c.bf16 %v207, %v205
    %v232 = vpack.c.bf16 %v208, %v206
    %v233 = vpack.c.bf16 %v211, %v209
    %v234 = vpack.c.bf16 %v212, %v210
    %v235 = vpack.c.bf16 %v215, %v213
    %v236 = vpack.c.bf16 %v216, %v214
    %v237 = vpack.c.bf16 %v219, %v217
    %v238 = vpack.c.bf16 %v220, %v218
    %v239 = vpack.c.bf16 %v223, %v221
    %v240 = vpack.c.bf16 %v224, %v222
    %v241 = vsel %vm37, 1.0, 0.0
    %v242 = vsel %vm38, 1.0, 0.0
    %v243 = vpack.c.bf16 %v71, %v70
    %v244 = vunpack.c.l.bf16 %v243
    %v245 = vunpack.c.h.bf16 %v243
    %v246 = vsub.f32 %v70, %v244
    %v247 = vsub.f32 %v71, %v245
    %v248 = vpack.c.bf16 %v103, %v102
    %v249 = vunpack.c.l.bf16 %v248
    %v250 = vunpack.c.h.bf16 %v248
    %v251 = vsub.f32 %v102, %v249
    %v252 = vsub.f32 %v103, %v250
    %v255 = vrot.slane %v249, 3
    %v256 = vrot.slane %v250, 3
    %v261 = vrot.slane %v251, 2
    %v262 = vrot.slane %v252, 2
    %vm265 = vcmask 1040384
    %v266 = vsel %vm265, %v244, %v246
    %v267 = vsel %vm265, %v245, %v247
    %vm268 = vcmask 1041408
    %v269 = vsel %vm268, %v266, %v241
    %v270 = vsel %vm268, %v267, %v242
    %v271 = vsel %vm55, %v269, %v255
    %v272 = vsel %vm55, %v270, %v256
    %vm273 = vcmask 1043456
    %v274 = vsel %vm273, %v271, %v261
    %v275 = vsel %vm273, %v272, %v262
    %v276 = vpack.c.bf16 %v274, %v274
    %v277 = vpack.c.bf16 %v275, %v275
    %278 = vmatpush.bf16.xpose.msra.mxu0 %v239
    %279 = vmatpush.bf16.xpose.msra.mxu0 %v237
    %280 = vmatpush.bf16.xpose.msra.mxu0 %v235
    %281 = vmatpush.bf16.xpose.msra.mxu0 %v233
    %282 = vmatpush.bf16.xpose.msra.mxu0 %v231
    %283 = vmatpush.bf16.xpose.msra.mxu0 %v229
    %284 = vmatpush.bf16.xpose.msra.mxu0 %v227
    %285 = vmatpush.bf16.xpose.msra.mxu0 %v225
    %286 = vmatmul.bf16.gmra.mxu0 %v276
    %v287 = vpop.f32.mrf.mxu0
    %v288 = vadd.f32 0.0, %v287
    %v289 = vpop.f32.mrf.mxu0
    %290 = vdwg.mxu0
    %291 = vmatpush.bf16.xpose.msra.mxu0 %v240
    %292 = vmatpush.bf16.xpose.msra.mxu0 %v238
    %293 = vmatpush.bf16.xpose.msra.mxu0 %v236
    %294 = vmatpush.bf16.xpose.msra.mxu0 %v234
    %295 = vmatpush.bf16.xpose.msra.mxu0 %v232
    %296 = vmatpush.bf16.xpose.msra.mxu0 %v230
    %297 = vmatpush.bf16.xpose.msra.mxu0 %v228
    %298 = vmatpush.bf16.xpose.msra.mxu0 %v226
    %299 = vmatmul.bf16.gmra.mxu0 %v277
    %v300 = vpop.f32.mrf.mxu0
    %v301 = vadd.f32 %v288, %v300
    %v302 = vpop.f32.mrf.mxu0
    %303 = vdwg.mxu0
    %v304 = vld [vmem:[#allocation5] sm:$0x1f]
    %v305 = vadd.f32 %v304, %v301
    %306 = vst [vmem:[#allocation5] sm:$0x1f] %v305
    // Predicated region
    $region14: #{tpu_custom_call.1} parent=1 // pred_check
      _
    $region15: #{tpu_custom_call.1} parent=1 // pred_check_branch
      %308 = sbr.rel (0) target = $region17
    $region16: #{tpu_custom_call.1} parent=1 // pred_region
      %310 = vsyncadd [#allocation4], 0
      %s312 = sshll.u32 [#allocation5], 4
      %s313 = int_to_ptr.vmem [resolvable:$true] %s312
      %s314 = sshll.u32 %s1, 4
      %s315 = int_to_ptr.hbm [resolvable:$true] %s314
      %317 = dma.vmem_to_hbm [thread:$0]  %s313, 128, %s315, [#allocation4]
    $region17: #{tpu_custom_call.1} parent=1 // pred_fallthru
      _
    // Predicated region
    $region18: #{tpu_custom_call.1} parent=1 // pred_check
      _
    $region19: #{tpu_custom_call.1} parent=1 // pred_check_branch
      %319 = sbr.rel (0) target = $region21
    $region20: #{tpu_custom_call.1} parent=1 // pred_region
      %321 = dma.done [#allocation4], 128
    $region21: #{tpu_custom_call.1} parent=1 // pred_fallthru
      _
    %322 = vsyncpa [#allocation3], 1
    %323 = vsyncpa [#allocation4], 1

</llo_original>
